<compile_context>
chip_gen: v6e
topology: v6e:2x2x1
jax: 0.10.0
libtpu: 0.0.40
codegen_flags: <defaults>
</compile_context>

<pallas_src>
import jax
import jax.numpy as jnp
from jax.experimental import pallas as pl
from jax.experimental.pallas import tpu as pltpu


def _round_up(x: int, m: int) -> int:
    return ((x + m - 1) // m) * m


def _choose_row_tile(rows: int, cap: int) -> int:
    """Row tile: multiple of 8 (or the whole extent when rows <= 8), <= cap,
    chosen to minimize zero-row padding; prefers >= 2 tiles (v7x megacore)."""
    if rows <= 8:
        return rows
    rows8 = _round_up(rows, 8)
    cap = max(8, min(cap, rows8))
    if rows8 >= 16:  # keep at least 2 row tiles so both v7x TensorCores get work
        cap = min(cap, _round_up(max(8, rows8 // 2), 8))
    best_tm, best_pad = 8, _round_up(rows, 8) - rows
    tm = (cap // 8) * 8
    while tm >= 8:
        pad = _round_up(rows, tm) - rows
        if pad < best_pad or (pad == best_pad and tm > best_tm):
            best_tm, best_pad = tm, pad
        tm -= 8
    return best_tm


# ----------------------------- Pallas kernels ------------------------------ #

def _shared_head_resident_kernel(x_ref, w_ref, b_ref, o_ref):
    # x_ref: [TM, NF] (orig dtype), w_ref: [NF, TWP] bf16 (VMEM-resident),
    # b_ref: [1, TWP] f32, o_ref: [TM, TWP]
    acc = jnp.dot(x_ref[...].astype(jnp.bfloat16), w_ref[...],
                  preferred_element_type=jnp.float32)
    o_ref[...] = (acc + b_ref[...]).astype(o_ref.dtype)


def _shared_head_ktiled_kernel(x_ref, w_ref, b_ref, o_ref, acc_ref):
    # Fallback when the full weight does not fit VMEM.
    # x_ref: [TM, TK], w_ref: [TK, TWP] bf16, b_ref: [1, TWP] f32,
    # o_ref: [TM, TWP], acc_ref: [TM, TWP] f32
    k = pl.program_id(1)

    @pl.when(k == 0)
    def _():
        acc_ref[...] = jnp.zeros_like(acc_ref)

    acc_ref[...] += jnp.dot(x_ref[...].astype(jnp.bfloat16), w_ref[...],
                            preferred_element_type=jnp.float32)

    @pl.when(k == pl.num_programs(1) - 1)
    def _():
        o_ref[...] = (acc_ref[...] + b_ref[...]).astype(o_ref.dtype)


def _individual_head_kernel(x_ref, w_ref, b_ref, o_ref, acc_ref):
    # Variable-leading layout; one batched MXU dot per step (no sublane slicing).
    # x_ref: [VB, BS, TK] (orig dtype), w_ref: [VB, TK, TWP] bf16,
    # b_ref: [VB, 1, TWP] f32, o_ref/acc_ref: [VB, BS, TWP]
    k = pl.program_id(1)

    @pl.when(k == 0)
    def _():
        acc_ref[...] = jnp.zeros_like(acc_ref)

    acc_ref[...] += jax.lax.dot_general(
        x_ref[...].astype(jnp.bfloat16), w_ref[...],
        dimension_numbers=(((2,), (1,)), ((0,), (0,))),
        preferred_element_type=jnp.float32)

    @pl.when(k == pl.num_programs(1) - 1)
    def _():
        o_ref[...] = (acc_ref[...] + b_ref[...]).astype(o_ref.dtype)


# ------------------------------ Wrappers ----------------------------------- #

_VMEM_LIMIT = 48 * 1024 * 1024   # <= v7x 64 MiB physical; plenty on v5e/v6e
_TILE_BUDGET = 40 * 1024 * 1024  # what we let the tiles themselves consume


@jax.jit
def flatten_head_shared(x, w, b):
    """Non-individual head.

    x: [bs, n_vars, d_model, patch_num]
    w: [nf, target_window]   (nf = d_model * patch_num, pre-transposed from torch)
    b: [target_window]
    returns: [bs, n_vars, target_window]
    """
    bs, n_vars, d_model, patch_num = x.shape
    nf = d_model * patch_num
    tw = w.shape[1]
    rows = bs * n_vars
    twp = _round_up(tw, 128)           # lane-dense output width (zero-padded cols)

    x_item = jnp.dtype(x.dtype).itemsize
    out_item = x_item

    # Pure metadata reshape — x is NOT padded/cast in the wrapper (HBM-bound kernel;
    # the bf16 cast happens per-tile inside the kernel).
    x2d = x.reshape(rows, nf)
    w_p = jnp.pad(w, ((0, 0), (0, twp - tw))).astype(jnp.bfloat16)
    b_p = jnp.pad(b, (0, twp - tw)).astype(jnp.float32).reshape(1, twp)

    w_resident_bytes = 2 * nf * twp * 2   # double-buffered bf16 weight slab

    if w_resident_bytes <= _TILE_BUDGET // 2:
        # ---- Path A: weight fully VMEM-resident, grid over row tiles only ----
        per_row = 2 * (nf * x_item + twp * out_item)   # double-buffered x + out rows
        tm_cap = max(8, min(1024, (_TILE_BUDGET - w_resident_bytes) // max(per_row, 1)))
        tm = _choose_row_tile(rows, tm_cap)
        rows_p = _round_up(rows, tm)
        if rows_p != rows:
            x2d = jnp.pad(x2d, ((0, rows_p - rows), (0, 0)))

        out = pl.pallas_call(
            _shared_head_resident_kernel,
            out_shape=jax.ShapeDtypeStruct((rows_p, twp), x.dtype),
            grid_spec=pltpu.PrefetchScalarGridSpec(
                num_scalar_prefetch=0,
                grid=(rows_p // tm,),
                in_specs=[
                    pl.BlockSpec((tm, nf), lambda i: (i, 0)),
                    pl.BlockSpec((nf, twp), lambda i: (0, 0)),   # constant -> single DMA
                    pl.BlockSpec((1, twp), lambda i: (0, 0)),
                ],
                out_specs=pl.BlockSpec((tm, twp), lambda i: (i, 0)),
            ),
            compiler_params=pltpu.CompilerParams(
                dimension_semantics=("parallel",),
                vmem_limit_bytes=_VMEM_LIMIT,
            ),
        )(x2d, w_p, b_p)
    else:
        # ---- Path B: weight too large for VMEM residency — K grid axis + f32 acc ----
        tk = 512                                   # multiple of 256 (v6e/v7x MXU shape)
        nf_p = _round_up(nf, tk)
        per_row = 2 * (tk * x_item + twp * out_item) + twp * 4
        w_tile_bytes = 2 * tk * twp * 2
        tm_cap = max(8, min(1024, (_TILE_BUDGET - w_tile_bytes) // max(per_row, 1)))
        tm = _choose_row_tile(rows, tm_cap)
        rows_p = _round_up(rows, tm)
        # TODO(synk): this pad pass over x is only paid in the huge-weight fallback.
        x2d = jnp.pad(x2d, ((0, rows_p - rows), (0, nf_p - nf)))
        w_kp = jnp.pad(w_p, ((0, nf_p - nf), (0, 0)))

        out = pl.pallas_call(
            _shared_head_ktiled_kernel,
            out_shape=jax.ShapeDtypeStruct((rows_p, twp), x.dtype),
            grid_spec=pltpu.PrefetchScalarGridSpec(
                num_scalar_prefetch=0,
                grid=(rows_p // tm, nf_p // tk),
                in_specs=[
                    pl.BlockSpec((tm, tk), lambda i, k: (i, k)),
                    pl.BlockSpec((tk, twp), lambda i, k: (k, 0)),
                    pl.BlockSpec((1, twp), lambda i, k: (0, 0)),
                ],
                out_specs=pl.BlockSpec((tm, twp), lambda i, k: (i, 0)),
                scratch_shapes=[pltpu.VMEM((tm, twp), jnp.float32)],
            ),
            compiler_params=pltpu.CompilerParams(
                dimension_semantics=("parallel", "arbitrary"),
                vmem_limit_bytes=_VMEM_LIMIT,
            ),
        )(x2d, w_kp, b_p)

    # TODO(synk): if the consumer can take the padded (rows_p, twp) slab (or bf16),
    # return it directly and skip this epilogue HBM round trip.
    return out[:rows, :tw].reshape(bs, n_vars, tw)


@jax.jit
def flatten_head_individual(x, w, b):
    """Individual head (one Linear per variable).

    x: [bs, n_vars, d_model, patch_num]
    w: [n_vars, nf, target_window]
    b: [n_vars, target_window]
    returns: [bs, n_vars, target_window]
    """
    bs, n_vars, d_model, patch_num = x.shape
    nf = d_model * patch_num
    tw = w.shape[-1]
    twp = _round_up(tw, 128)

    x_item = jnp.dtype(x.dtype).itemsize
    out_item = x_item

    def step_bytes(vb_, tk_):
        # Double-buffered input/weight/bias/output blocks + f32 accumulator scratch.
        return (2 * vb_ * bs * tk_ * x_item
                + 2 * vb_ * tk_ * twp * 2
                + 2 * vb_ * bs * twp * out_item
                + 2 * vb_ * twp * 4
                + vb_ * bs * twp * 4)

    # Variables-per-block under the VMEM budget (never the whole [n_vars, nf, twp] slab).
    vb = 1
    for cand in (8, 4, 2, 1):
        if cand <= max(1, n_vars) and step_bytes(cand, nf) <= _TILE_BUDGET // 2:
            vb = cand
            break
    # Keep >= 2 grid steps along the (parallel) variable axis when possible (v7x).
    while vb > 1 and _round_up(n_vars, vb) // vb < 2:
        vb //= 2

    if step_bytes(vb, nf) <= _TILE_BUDGET // 2:
        tk = nf                      # whole contraction in one step (common case)
    else:                            # vb == 1 and a single variable's weight is still huge
        tk = 2048
        while tk > 256 and step_bytes(1, tk) > _TILE_BUDGET // 2:
            tk //= 2
    nf_p = _round_up(nf, tk)
    n_vars_p = _round_up(n_vars, vb)

    # Variable-leading layout so the kernel indexes variables on the leading dim
    # (free address offset) instead of slicing the sublane axis.
    x_t = jnp.transpose(x.reshape(bs, n_vars, nf), (1, 0, 2))       # [n_vars, bs, nf]
    if n_vars_p != n_vars or nf_p != nf:
        x_t = jnp.pad(x_t, ((0, n_vars_p - n_vars), (0, 0), (0, nf_p - nf)))
    w_p = jnp.pad(w, ((0, n_vars_p - n_vars), (0, nf_p - nf), (0, twp - tw))
                  ).astype(jnp.bfloat16)
    b_p = jnp.pad(b, ((0, n_vars_p - n_vars), (0, twp - tw))
                  ).astype(jnp.float32).reshape(n_vars_p, 1, twp)

    out = pl.pallas_call(
        _individual_head_kernel,
        out_shape=jax.ShapeDtypeStruct((n_vars_p, bs, twp), x.dtype),
        grid_spec=pltpu.PrefetchScalarGridSpec(
            num_scalar_prefetch=0,
            grid=(n_vars_p // vb, nf_p // tk),
            in_specs=[
                pl.BlockSpec((vb, bs, tk), lambda i, k: (i, 0, k)),
                pl.BlockSpec((vb, tk, twp), lambda i, k: (i, k, 0)),
                pl.BlockSpec((vb, 1, twp), lambda i, k: (i, 0, 0)),
            ],
            out_specs=pl.BlockSpec((vb, bs, twp), lambda i, k: (i, 0, 0)),
            scratch_shapes=[pltpu.VMEM((vb, bs, twp), jnp.float32)],
        ),
        compiler_params=pltpu.CompilerParams(
            dimension_semantics=("parallel", "arbitrary"),
            vmem_limit_bytes=_VMEM_LIMIT,
        ),
    )(x_t, w_p, b_p)

    return jnp.transpose(out[:n_vars, :, :tw], (1, 0, 2))           # [bs, n_vars, tw]


# ------------------------------ References ---------------------------------- #

def _ref_shared(x, w, b):
    bs, n_vars, d, p = x.shape
    z = x.reshape(bs, n_vars, d * p)
    return z @ w + b


def _ref_individual(x, w, b):
    bs, n_vars, d, p = x.shape
    z = x.reshape(bs, n_vars, d * p)                       # [bs, nv, nf]
    return jnp.einsum("bvn,vnt->bvt", z, w) + b[None, :, :]


# --------------------------------- Main ------------------------------------- #

if __name__ == "__main__":
    key = jax.random.PRNGKey(0)

    bs, n_vars, d_model, patch_num = 2, 4, 16, 8
    nf = d_model * patch_num          # 128
    target_window = 32

    k_x, k_w, k_b, k_wi, k_bi = jax.random.split(key, 5)

    x = jax.random.normal(k_x, (bs, n_vars, d_model, patch_num), dtype=jnp.float32)

    # Shared-head parameters (nn.Linear(nf, target_window)); weight pre-transposed.
    w_shared = jax.random.normal(k_w, (nf, target_window), dtype=jnp.float32) * 0.02
    b_shared = jax.random.normal(k_b, (target_window,), dtype=jnp.float32) * 0.02

    # Individual-head parameters (one Linear per variable).
    w_ind = jax.random.normal(k_wi, (n_vars, nf, target_window), dtype=jnp.float32) * 0.02
    b_ind = jax.random.normal(k_bi, (n_vars, target_window), dtype=jnp.float32) * 0.02

    # Non-individual branch (bf16 MXU inputs, f32 accumulation -> looser tolerance).
    y_shared = jax.block_until_ready(flatten_head_shared(x, w_shared, b_shared))
    y_shared_ref = _ref_shared(x, w_shared, b_shared)
    assert y_shared.shape == (bs, n_vars, target_window)
    assert jnp.allclose(y_shared, y_shared_ref, atol=2e-2, rtol=2e-2)

    # Individual branch.
    y_ind = jax.block_until_ready(flatten_head_individual(x, w_ind, b_ind))
    y_ind_ref = _ref_individual(x, w_ind, b_ind)
    assert y_ind.shape == (bs, n_vars, target_window)
    assert jnp.allclose(y_ind, y_ind_ref, atol=2e-2, rtol=2e-2)

    print("KERNEL_OK")
</pallas_src>

<mosaic_0001>
module attributes {stable_mosaic.version = 11 : i64} {
  func.func @_shared_head_resident_kernel(%arg0: i32, %arg1: memref<8x128xf32, #tpu.memory_space<vmem>>, %arg2: memref<128x128xbf16, #tpu.memory_space<vmem>>, %arg3: memref<1x128xf32, #tpu.memory_space<vmem>>, %arg4: memref<8x128xf32, #tpu.memory_space<vmem>>) attributes {dimension_semantics = [#tpu.dimension_semantics<parallel>], iteration_bounds = array<i64: 1>, scalar_prefetch = 0 : i64, scratch_operands = 0 : i64, tpu.core_type = #tpu.core_type<tc>, window_params = [{transform_indices = @transform_0, window_bounds = array<i64: 8, 128>}, {pipeline_mode = #tpu.pipeline_mode<synchronous>, transform_indices = @transform_1, window_bounds = array<i64: 128, 128>}, {pipeline_mode = #tpu.pipeline_mode<synchronous>, transform_indices = @transform_2, window_bounds = array<i64: 1, 128>}, {transform_indices = @transform_3, window_bounds = array<i64: 8, 128>}]} {
    %c0 = arith.constant 0 : index
    %c0_0 = arith.constant 0 : index
    %0 = vector.load %arg1[%c0, %c0_0] : memref<8x128xf32, #tpu.memory_space<vmem>>, vector<8x128xf32>
    %1 = arith.truncf %0 : vector<8x128xf32> to vector<8x128xbf16>
    %c0_1 = arith.constant 0 : index
    %c0_2 = arith.constant 0 : index
    %2 = vector.load %arg2[%c0_1, %c0_2] : memref<128x128xbf16, #tpu.memory_space<vmem>>, vector<128x128xbf16>
    %cst = arith.constant dense<0.000000e+00> : vector<8x128xf32>
    %3 = tpu.matmul %1, %2, %cst {dimension_numbers = #tpu.dot_dimension_numbers<[1], [0], [0], [1], [0, 0, 1, 1], [], []>} : vector<8x128xbf16>, vector<128x128xbf16>, vector<8x128xf32> -> vector<8x128xf32>
    %c0_3 = arith.constant 0 : index
    %c0_4 = arith.constant 0 : index
    %4 = vector.load %arg3[%c0_3, %c0_4] : memref<1x128xf32, #tpu.memory_space<vmem>>, vector<1x128xf32>
    %5 = vector.broadcast %4 : vector<1x128xf32> to vector<8x128xf32>
    %6 = arith.addf %3, %5 : vector<8x128xf32>
    %c0_5 = arith.constant 0 : index
    %c0_6 = arith.constant 0 : index
    %7 = vector.load %arg4[%c0_5, %c0_6] : memref<8x128xf32, #tpu.memory_space<vmem>>, vector<8x128xf32>
    tpu.vector_store %arg4[%c0_5, %c0_6], %6 {strides = array<i32>} : memref<8x128xf32, #tpu.memory_space<vmem>>, vector<8x128xf32>,
    return
  }
  func.func @transform_0(%arg0: i32) -> (i32, i32) {
    %c0_i32 = arith.constant 0 : i32
    %c0_i32_0 = arith.constant 0 : i32
    return %arg0, %c0_i32 : i32, i32
  }
  func.func @transform_1(%arg0: i32) -> (i32, i32) {
    %c0_i32 = arith.constant 0 : i32
    %c0_i32_0 = arith.constant 0 : i32
    %c0_i32_1 = arith.constant 0 : i32
    return %c0_i32, %c0_i32_0 : i32, i32
  }
  func.func @transform_2(%arg0: i32) -> (i32, i32) {
    %c0_i32 = arith.constant 0 : i32
    %c0_i32_0 = arith.constant 0 : i32
    %c0_i32_1 = arith.constant 0 : i32
    return %c0_i32, %c0_i32_0 : i32, i32
  }
  func.func @transform_3(%arg0: i32) -> (i32, i32) {
    %c0_i32 = arith.constant 0 : i32
    %c0_i32_0 = arith.constant 0 : i32
    return %arg0, %c0_i32 : i32, i32
  }
}

</mosaic_0001>

<llo_original>
// kernel: flatten_head_shared.1
$region0: #{flatten_head_shared.1}
  #allocation0 [shape = 'u32[]', space=smem, size = 0x4, offset = 0x4, fixed_abs, tag = 'smem constant byte address 0x4 - core index']
  #allocation1 [shape = 'u32[144,128]{1,0:T(1,128)}', space=vmem, size = 0x12000, scoped, tag = 'internal scratch']
  %s0 = inlined_call_operand.vmem [shape: f32[8,128], index: 0, kind: input, shape index: {}]
  %s1 = inlined_call_operand.vmem [shape: bf16[128,128], index: 1, kind: input, shape index: {}]
  %s2 = inlined_call_operand.vmem [shape: f32[1,128], index: 2, kind: input, shape index: {}]
  %s3 = inlined_call_operand.hbm [shape: f32[8,128], index: 3, kind: output, shape index: {}]
  %s4 = sld [smem:[#allocation0]]
  $region22: #{flatten_head_shared.1} parent=0
    _
  %s6 = ssub.s32 1, %s4
  %s7 = scalar_select 0, %s6, %s4
  $region1: #{flatten_head_shared.1} parent=0
    #allocation2 [shape = 'u8[4096]{0}', space=vmem, size = 0x1000, scoped, tag = 'output window, operand 0, single buffered']
    #allocation3 [shape = 's32[1]{0}', space=sflag, size = 0x4, scoped, tag = 'scoped memory for flatten_head_shared.1']
    %8 = vsyncpa [#allocation3], 0
    // Predicated region
    $region2: #{flatten_head_shared.1} parent=1 // pred_check
      _
    $region3: #{flatten_head_shared.1} parent=1 // pred_check_branch
      %10 = sbr.rel (0) target = $region5
    $region4: #{flatten_head_shared.1} parent=1 // pred_region
      _
    $region5: #{flatten_head_shared.1} parent=1 // pred_fallthru
      _
    // Predicated region
    $region6: #{flatten_head_shared.1} parent=1 // pred_check
      _
    $region7: #{flatten_head_shared.1} parent=1 // pred_check_branch
      %12 = sbr.rel (0) target = $region9
    $region8: #{flatten_head_shared.1} parent=1 // pred_region
      _
    $region9: #{flatten_head_shared.1} parent=1 // pred_fallthru
      _
    // Predicated region
    $region10: #{flatten_head_shared.1} parent=1 // pred_check
      _
    $region11: #{flatten_head_shared.1} parent=1 // pred_check_branch
      %14 = sbr.rel (0) target = $region13
    $region12: #{flatten_head_shared.1} parent=1 // pred_region
      _
    $region13: #{flatten_head_shared.1} parent=1 // pred_fallthru
      _
    %v16 = vld [vmem:[%s0] sm:$0xff]
    %v17 = vpack.c.bf16 %v16, %v16
    %v18 = vld [vmem:[%s1] sm:$0xf]
    %v19 = vld [vmem:[%s1 + $0x4] sm:$0xf]
    %v20 = vld [vmem:[%s1 + $0x8] sm:$0xf]
    %v21 = vld [vmem:[%s1 + $0xc] sm:$0xf]
    %v22 = vld [vmem:[%s1 + $0x10] sm:$0xf]
    %v23 = vld [vmem:[%s1 + $0x14] sm:$0xf]
    %v24 = vld [vmem:[%s1 + $0x18] sm:$0xf]
    %v25 = vld [vmem:[%s1 + $0x1c] sm:$0xf]
    %v26 = vld [vmem:[%s1 + $0x20] sm:$0xf]
    %v27 = vld [vmem:[%s1 + $0x24] sm:$0xf]
    %v28 = vld [vmem:[%s1 + $0x28] sm:$0xf]
    %v29 = vld [vmem:[%s1 + $0x2c] sm:$0xf]
    %v30 = vld [vmem:[%s1 + $0x30] sm:$0xf]
    %v31 = vld [vmem:[%s1 + $0x34] sm:$0xf]
    %v32 = vld [vmem:[%s1 + $0x38] sm:$0xf]
    %v33 = vld [vmem:[%s1 + $0x3c] sm:$0xf]
    %v34 = vld [vmem:[%s2] sm:$0x1]
    %v36 = vlaneseq
    %v37 = vshrl.u32 %v36, 7
    %v38 = vsub.s32 0, %v37
    %v39 = vrot.slane %v34, %v38
    %v57 = vunpack.c.l.b16 %v18
    %v58 = vunpack.c.l.b16 %v19
    %v59 = vunpack.c.l.b16 %v20
    %v60 = vunpack.c.l.b16 %v21
    %v61 = vunpack.c.l.b16 %v22
    %v62 = vunpack.c.l.b16 %v23
    %v63 = vunpack.c.l.b16 %v24
    %v64 = vunpack.c.l.b16 %v25
    %v65 = vunpack.c.l.b16 %v26
    %v66 = vunpack.c.l.b16 %v27
    %v67 = vunpack.c.l.b16 %v28
    %v68 = vunpack.c.l.b16 %v29
    %v69 = vunpack.c.l.b16 %v30
    %v70 = vunpack.c.l.b16 %v31
    %v71 = vunpack.c.l.b16 %v32
    %v72 = vunpack.c.l.b16 %v33
    %v73 = vpack.c.b16 %v58, %v57
    %v74 = vpack.c.b16 %v60, %v59
    %v75 = vpack.c.b16 %v62, %v61
    %v76 = vpack.c.b16 %v64, %v63
    %v77 = vpack.c.b16 %v66, %v65
    %v78 = vpack.c.b16 %v68, %v67
    %v79 = vpack.c.b16 %v70, %v69
    %v80 = vpack.c.b16 %v72, %v71
    %89 = vmatprep.subr.bf16.mxu0 0
    %90 = vmatpush1.bf16.msra.mxu0 %v80
    %91 = vmatprep.subr.bf16.mxu0 0
    %92 = vmatpush1.bf16.msra.mxu0 %v79
    %93 = vmatprep.subr.bf16.mxu0 0
    %94 = vmatpush1.bf16.msra.mxu0 %v78
    %95 = vmatprep.subr.bf16.mxu0 0
    %96 = vmatpush1.bf16.msra.mxu0 %v77
    %97 = vmatprep.subr.bf16.mxu0 0
    %98 = vmatpush1.bf16.msra.mxu0 %v76
    %99 = vmatprep.subr.bf16.mxu0 0
    %100 = vmatpush1.bf16.msra.mxu0 %v75
    %101 = vmatprep.subr.bf16.mxu0 0
    %102 = vmatpush1.bf16.msra.mxu0 %v74
    %103 = vmatprep.subr.bf16.mxu0 0
    %104 = vmatpush1.bf16.msra.mxu0 %v73
    %105 = vmatprep.subr.bf16.mxu0 0
    %106 = vmatpush2.bf16.msra.mxu0 0
    %107 = vmatprep.subr.bf16.mxu0 0
    %108 = vmatpush2.bf16.msra.mxu0 0
    %109 = vmatprep.subr.bf16.mxu0 0
    %110 = vmatpush2.bf16.msra.mxu0 0
    %111 = vmatprep.subr.bf16.mxu0 0
    %112 = vmatpush2.bf16.msra.mxu0 0
    %113 = vmatprep.subr.bf16.mxu0 0
    %114 = vmatpush2.bf16.msra.mxu0 0
    %115 = vmatprep.subr.bf16.mxu0 0
    %116 = vmatpush2.bf16.msra.mxu0 0
    %117 = vmatprep.subr.bf16.mxu0 0
    %118 = vmatpush2.bf16.msra.mxu0 0
    %119 = vmatprep.subr.bf16.mxu0 0
    %120 = vmatpush2.bf16.msra.mxu0 0
    %121 = vmatprep.mubr.bf16.mxu0 0
    %122 = vmatmul.mubr.bf16.gmra.mxu0 %v17
    %v123 = vpop.f32.mrf.mxu0
    %v124 = vadd.f32 %v39, %v123
    %v125 = vpop.f32.mrf.mxu0
    %v126 = vpop.f32.mrf.mxu0
    %v127 = vpop.f32.mrf.mxu0
    %128 = vdwg.mxu0
    %129 = vst [vmem:[#allocation2] sm:$0xff] %v124
    // Predicated region
    $region14: #{flatten_head_shared.1} parent=1 // pred_check
      _
    $region15: #{flatten_head_shared.1} parent=1 // pred_check_branch
      %131 = sbr.rel (0) target = $region17
    $region16: #{flatten_head_shared.1} parent=1 // pred_region
      %s133 = ssub.s32 128, 128
      %134 = vsyncadd [#allocation3], %s133
      %s136 = sshll.u32 [#allocation2], 4
      %s137 = int_to_ptr.vmem [resolvable:$true] %s136
      %139 = dma.vmem_to_hbm [thread:$0]  %s137, 128, %s3, [#allocation3]
    $region17: #{flatten_head_shared.1} parent=1 // pred_fallthru
      _
    // Predicated region
    $region18: #{flatten_head_shared.1} parent=1 // pred_check
      _
    $region19: #{flatten_head_shared.1} parent=1 // pred_check_branch
      %141 = sbr.rel (0) target = $region21
    $region20: #{flatten_head_shared.1} parent=1 // pred_region
      %142 = dma.done [#allocation3], 128
    $region21: #{flatten_head_shared.1} parent=1 // pred_fallthru
      _
    %143 = vsyncpa [#allocation3], 1

</llo_original>
